<compile_context>
chip_gen: v6e
topology: v6e:2x2x1
jax: 0.10.0
libtpu: 0.0.40
codegen_flags: <defaults>
</compile_context>

<pallas_src>
import jax
import jax.numpy as jnp
from jax.experimental import pallas as pl
from jax.experimental.pallas import tpu as pltpu

LANE = 128
SUBLANE = 8
MAX_TILE_ROWS = 8192          # (8192,128) f32 block = 4 MiB/input/step
INNER_ROWS = 512              # in-kernel chunk: 256 KiB/operand in f32
VMEM_LIMIT_BYTES = 32 * 1024 * 1024


def _row_align(dtype):
    """Rows per native sublane tile for this dtype (8 for f32, 16 bf16, 32 i8/bool)."""
    itemsize = jnp.dtype(dtype).itemsize
    return SUBLANE * max(1, 4 // max(1, itemsize))


def _make_ti_kernel(tile_rows, inner_rows, valid_last_rows, need_mask):
    """Build the kernel with static tiling parameters closed over."""

    def kernel(p_ref, g_ref, spg_ref, ssum_ref, acc_pg_ref, acc_s_ref):
        i = pl.program_id(0)
        nsteps = pl.num_programs(0)

        @pl.when(i == 0)
        def _init():
            acc_pg_ref[...] = jnp.zeros_like(acc_pg_ref)
            acc_s_ref[...] = jnp.zeros_like(acc_s_ref)

        def accumulate(block_valid_rows):
            # Statically unrolled chunk loop over the resident VMEM block.
            for start in range(0, tile_rows, inner_rows):
                size = min(inner_rows, tile_rows - start)
                if start >= block_valid_rows:
                    continue  # chunk entirely past the array: skip statically
                p = p_ref[pl.ds(start, size), :].astype(jnp.float32)
                g = g_ref[pl.ds(start, size), :].astype(jnp.float32)
                if start + size > block_valid_rows:
                    # Single partially-valid chunk of the ragged last block.
                    nvalid = block_valid_rows - start
                    rid = jax.lax.broadcasted_iota(jnp.int32, (size, LANE), 0)
                    keep = rid < nvalid
                    p = jnp.where(keep, p, 0.0)
                    g = jnp.where(keep, g, 0.0)
                # Pure-VPU accumulation into resident (8,128) accumulators.
                acc_pg_ref[...] += jnp.sum(
                    (p * g).reshape(size // SUBLANE, SUBLANE, LANE), axis=0)
                acc_s_ref[...] += jnp.sum(
                    (p + g).reshape(size // SUBLANE, SUBLANE, LANE), axis=0)

        if need_mask:
            # Mask work only exists on the last grid step; the hot loop is clean.
            @pl.when(i < nsteps - 1)
            def _full():
                accumulate(tile_rows)

            @pl.when(i == nsteps - 1)
            def _ragged():
                accumulate(valid_last_rows)
        else:
            accumulate(tile_rows)

        @pl.when(i == nsteps - 1)
        def _finalize():
            # Single cross-lane/sublane reduce + SMEM scalar write, last step only.
            spg_ref[0] = jnp.sum(acc_pg_ref[...])    # sum(p*g)
            ssum_ref[0] = jnp.sum(acc_s_ref[...])    # sum(p) + sum(g)

    return kernel


def ti_loss(output, target, *, max_tile_rows=MAX_TILE_ROWS):
    """Pallas TPU implementation of TILoss.forward. Returns (loss, ti) scalars."""
    p = output.reshape(-1)
    g = target.reshape(-1)
    total = p.shape[0]

    # Feed only an aligned prefix to the kernel (no full-array pad/copy in HBM).
    align_rows = max(_row_align(p.dtype), _row_align(g.dtype))
    chunk_elems = align_rows * LANE
    aligned = (total // chunk_elems) * chunk_elems

    if aligned > 0:
        rows = aligned // LANE
        p2 = p[:aligned].reshape(rows, LANE)
        g2 = g[:aligned].reshape(rows, LANE)

        tile_rows = min(max_tile_rows, rows)
        tile_rows = max(align_rows, (tile_rows // align_rows) * align_rows)
        num_tiles = pl.cdiv(rows, tile_rows)
        valid_last_rows = rows - (num_tiles - 1) * tile_rows
        need_mask = (rows % tile_rows) != 0
        inner_rows = min(INNER_ROWS, tile_rows)

        kernel = _make_ti_kernel(tile_rows, inner_rows, valid_last_rows, need_mask)

        s_pg_k, s_sum_k = pl.pallas_call(
            kernel,
            out_shape=(
                jax.ShapeDtypeStruct((1,), jnp.float32),  # sum(p*g)
                jax.ShapeDtypeStruct((1,), jnp.float32),  # sum(p)+sum(g)
            ),
            grid_spec=pltpu.PrefetchScalarGridSpec(
                num_scalar_prefetch=0,
                grid=(num_tiles,),
                in_specs=[
                    pl.BlockSpec((tile_rows, LANE), lambda i: (i, 0)),
                    pl.BlockSpec((tile_rows, LANE), lambda i: (i, 0)),
                ],
                out_specs=[
                    pl.BlockSpec(memory_space=pltpu.SMEM),
                    pl.BlockSpec(memory_space=pltpu.SMEM),
                ],
                scratch_shapes=[
                    pltpu.VMEM((SUBLANE, LANE), jnp.float32),  # acc sum(p*g)
                    pltpu.VMEM((SUBLANE, LANE), jnp.float32),  # acc sum(p+g)
                ],
            ),
            compiler_params=pltpu.CompilerParams(
                dimension_semantics=("arbitrary",),   # sequential reduction axis
                vmem_limit_bytes=VMEM_LIMIT_BYTES,
            ),
        )(p2, g2)
        s_pg = s_pg_k[0]
        s_sum = s_sum_k[0]
    else:
        s_pg = jnp.float32(0.0)
        s_sum = jnp.float32(0.0)

    if aligned < total:
        # Tiny unaligned tail (< align_rows*128 elements): reduce in the wrapper.
        tp = p[aligned:].astype(jnp.float32)
        tg = g[aligned:].astype(jnp.float32)
        s_pg = s_pg + jnp.dot(tp, tg)
        s_sum = s_sum + jnp.sum(tp) + jnp.sum(tg)

    smooth = jnp.float32(1.0)
    # ti = (S_pg + 1) / (S_pg + 0.5*(S_g - S_pg) + 0.5*(S_p - S_pg) + 1)
    #    = (S_pg + 1) / (0.5*(S_p + S_g) + 1)
    ti = (s_pg + smooth) / (0.5 * s_sum + smooth)
    loss = 1.0 - ti
    return loss, ti


def ti_loss_ref(output, target):
    """Pure-JAX reference (mirrors the PyTorch formula exactly)."""
    pi = output.reshape(-1).astype(jnp.float32)
    gi = target.reshape(-1).astype(jnp.float32)
    inter = jnp.dot(pi, gi)
    ia = jnp.dot(1.0 - pi, gi)
    ib = jnp.dot(1.0 - gi, pi)
    ti = (inter + 1.0) / (inter + 0.5 * ia + 0.5 * ib + 1.0)
    return 1.0 - ti, ti


def _check(output, target, tol=2e-4, **kw):
    loss, ti = ti_loss(output, target, **kw)
    loss, ti = jax.block_until_ready((loss, ti))
    loss_r, ti_r = ti_loss_ref(output, target)
    assert abs(float(loss) - float(loss_r)) < tol, (float(loss), float(loss_r))
    assert abs(float(ti) - float(ti_r)) < tol, (float(ti), float(ti_r))
    return float(loss), float(ti)


if __name__ == "__main__":
    key = jax.random.PRNGKey(0)
    keys = jax.random.split(key, 10)

    # Main example: small segmentation-style (N, C, H, W) prediction / target.
    output = jax.nn.sigmoid(jax.random.normal(keys[0], (2, 4, 16, 16), dtype=jnp.float32))
    target = (jax.random.uniform(keys[1], (2, 4, 16, 16)) > 0.5).astype(jnp.float32)
    _, ti_val = _check(output, target)
    # Mirrors the module's print('ti:{}'.format(ti.item())) side-effect (host-side).
    print("ti:{}".format(ti_val))

    # Unaligned total -> wrapper-side tail path (no host pad).
    out2 = jax.nn.sigmoid(jax.random.normal(keys[2], (3, 5, 17, 11), dtype=jnp.float32))
    tgt2 = (jax.random.uniform(keys[3], (3, 5, 17, 11)) > 0.5).astype(jnp.float32)
    _check(out2, tgt2)

    # Single tile, multiple inner chunks (512 + partial 256) inside the kernel.
    out3 = jax.nn.sigmoid(jax.random.normal(keys[4], (2, 4, 96, 128), dtype=jnp.float32))
    tgt3 = (jax.random.uniform(keys[5], (2, 4, 96, 128)) > 0.5).astype(jnp.float32)
    _check(out3, tgt3)

    # Multi-tile grid with a ragged, masked last block (small tile override so it
    # is exercised at small sizes; default tiles are 8192 rows).
    _check(out3, tgt3, max_tile_rows=80)

    # Narrow-dtype inputs (bf16) — the main roofline lever; cast happens in-kernel.
    out4 = jax.nn.sigmoid(jax.random.normal(keys[6], (2, 4, 16, 16))).astype(jnp.bfloat16)
    tgt4 = (jax.random.uniform(keys[7], (2, 4, 16, 16)) > 0.5).astype(jnp.bfloat16)
    _check(out4, tgt4)

    print("KERNEL_OK")
</pallas_src>

<mosaic_0001>
module attributes {stable_mosaic.version = 11 : i64} {
  func.func @kernel(%arg0: i32, %arg1: memref<16x128xf32, #tpu.memory_space<vmem>>, %arg2: memref<16x128xf32, #tpu.memory_space<vmem>>, %arg3: memref<1xf32, #tpu.memory_space<smem>>, %arg4: memref<1xf32, #tpu.memory_space<smem>>, %arg5: memref<8x128xf32, #tpu.memory_space<vmem>>, %arg6: memref<8x128xf32, #tpu.memory_space<vmem>>) attributes {dimension_semantics = [#tpu.dimension_semantics<arbitrary>], iteration_bounds = array<i64: 1>, scalar_prefetch = 0 : i64, scratch_operands = 2 : i64, tpu.core_type = #tpu.core_type<tc>, window_params = [{transform_indices = @transform_0, window_bounds = array<i64: 16, 128>}, {transform_indices = @transform_1, window_bounds = array<i64: 16, 128>}, {transform_indices = @transform_2, window_bounds = array<i64: 1>}, {transform_indices = @transform_3, window_bounds = array<i64: 1>}]} {
    %c0_i32 = arith.constant 0 : i32
    %0 = arith.cmpi eq, %arg0, %c0_i32 : i32
    %1 = arith.extui %0 : i1 to i32
    %c0_i32_0 = arith.constant 0 : i32
    %2 = arith.cmpi ne, %1, %c0_i32_0 : i32
    scf.if %2 {
      %cst_15 = arith.constant 0.000000e+00 : f32
      %20 = vector.broadcast %cst_15 : f32 to vector<8x128xf32>
      %c0_16 = arith.constant 0 : index
      %c0_17 = arith.constant 0 : index
      %21 = vector.load %arg5[%c0_16, %c0_17] : memref<8x128xf32, #tpu.memory_space<vmem>>, vector<8x128xf32>
      tpu.vector_store %arg5[%c0_16, %c0_17], %20 {strides = array<i32>} : memref<8x128xf32, #tpu.memory_space<vmem>>, vector<8x128xf32>,
      %cst_18 = arith.constant 0.000000e+00 : f32
      %22 = vector.broadcast %cst_18 : f32 to vector<8x128xf32>
      %c0_19 = arith.constant 0 : index
      %c0_20 = arith.constant 0 : index
      %23 = vector.load %arg6[%c0_19, %c0_20] : memref<8x128xf32, #tpu.memory_space<vmem>>, vector<8x128xf32>
      tpu.vector_store %arg6[%c0_19, %c0_20], %22 {strides = array<i32>} : memref<8x128xf32, #tpu.memory_space<vmem>>, vector<8x128xf32>,
    } else {
    }
    %c0 = arith.constant 0 : index
    %c0_1 = arith.constant 0 : index
    %3 = vector.load %arg1[%c0, %c0_1] : memref<16x128xf32, #tpu.memory_space<vmem>>, vector<16x128xf32>
    %c0_2 = arith.constant 0 : index
    %c0_3 = arith.constant 0 : index
    %4 = vector.load %arg2[%c0_2, %c0_3] : memref<16x128xf32, #tpu.memory_space<vmem>>, vector<16x128xf32>
    %c0_4 = arith.constant 0 : index
    %c0_5 = arith.constant 0 : index
    %5 = vector.load %arg5[%c0_4, %c0_5] : memref<8x128xf32, #tpu.memory_space<vmem>>, vector<8x128xf32>
    %6 = arith.mulf %3, %4 : vector<16x128xf32>
    %7 = vector.shape_cast %6 : vector<16x128xf32> to vector<2x8x128xf32>
    %cst = arith.constant dense<0.000000e+00> : vector<8x128xf32>
    %8 = vector.multi_reduction <add>, %7, %cst [0] : vector<2x8x128xf32> to vector<8x128xf32>
    %9 = arith.addf %5, %8 : vector<8x128xf32>
    %c0_6 = arith.constant 0 : index
    %c0_7 = arith.constant 0 : index
    %10 = vector.load %arg5[%c0_6, %c0_7] : memref<8x128xf32, #tpu.memory_space<vmem>>, vector<8x128xf32>
    tpu.vector_store %arg5[%c0_6, %c0_7], %9 {strides = array<i32>} : memref<8x128xf32, #tpu.memory_space<vmem>>, vector<8x128xf32>,
    %c0_8 = arith.constant 0 : index
    %c0_9 = arith.constant 0 : index
    %11 = vector.load %arg6[%c0_8, %c0_9] : memref<8x128xf32, #tpu.memory_space<vmem>>, vector<8x128xf32>
    %12 = arith.addf %3, %4 : vector<16x128xf32>
    %13 = vector.shape_cast %12 : vector<16x128xf32> to vector<2x8x128xf32>
    %cst_10 = arith.constant dense<0.000000e+00> : vector<8x128xf32>
    %14 = vector.multi_reduction <add>, %13, %cst_10 [0] : vector<2x8x128xf32> to vector<8x128xf32>
    %15 = arith.addf %11, %14 : vector<8x128xf32>
    %c0_11 = arith.constant 0 : index
    %c0_12 = arith.constant 0 : index
    %16 = vector.load %arg6[%c0_11, %c0_12] : memref<8x128xf32, #tpu.memory_space<vmem>>, vector<8x128xf32>
    tpu.vector_store %arg6[%c0_11, %c0_12], %15 {strides = array<i32>} : memref<8x128xf32, #tpu.memory_space<vmem>>, vector<8x128xf32>,
    %c0_i32_13 = arith.constant 0 : i32
    %17 = arith.cmpi eq, %arg0, %c0_i32_13 : i32
    %18 = arith.extui %17 : i1 to i32
    %c0_i32_14 = arith.constant 0 : i32
    %19 = arith.cmpi ne, %18, %c0_i32_14 : i32
    scf.if %19 {
      %c0_15 = arith.constant 0 : index
      %c0_16 = arith.constant 0 : index
      %20 = vector.load %arg5[%c0_15, %c0_16] : memref<8x128xf32, #tpu.memory_space<vmem>>, vector<8x128xf32>
      %21 = vector.shape_cast %20 : vector<8x128xf32> to vector<1x8x128xf32>
      %cst_17 = arith.constant dense<0.000000e+00> : vector<1xf32>
      %22 = vector.multi_reduction <add>, %21, %cst_17 [1, 2] : vector<1x8x128xf32> to vector<1xf32>
      %23 = vector.shape_cast %22 : vector<1xf32> to vector<1x1x1xf32>
      %24 = vector.extract %23[0, 0, 0] : f32 from vector<1x1x1xf32>
      %c0_18 = arith.constant 0 : index
      %25 = memref.load %arg3[%c0_18] : memref<1xf32, #tpu.memory_space<smem>>
      memref.store %24, %arg3[%c0_18] : memref<1xf32, #tpu.memory_space<smem>>
      %c0_19 = arith.constant 0 : index
      %c0_20 = arith.constant 0 : index
      %26 = vector.load %arg6[%c0_19, %c0_20] : memref<8x128xf32, #tpu.memory_space<vmem>>, vector<8x128xf32>
      %27 = vector.shape_cast %26 : vector<8x128xf32> to vector<1x8x128xf32>
      %cst_21 = arith.constant dense<0.000000e+00> : vector<1xf32>
      %28 = vector.multi_reduction <add>, %27, %cst_21 [1, 2] : vector<1x8x128xf32> to vector<1xf32>
      %29 = vector.shape_cast %28 : vector<1xf32> to vector<1x1x1xf32>
      %30 = vector.extract %29[0, 0, 0] : f32 from vector<1x1x1xf32>
      %c0_22 = arith.constant 0 : index
      %31 = memref.load %arg4[%c0_22] : memref<1xf32, #tpu.memory_space<smem>>
      memref.store %30, %arg4[%c0_22] : memref<1xf32, #tpu.memory_space<smem>>
    } else {
    }
    return
  }
  func.func @transform_0(%arg0: i32) -> (i32, i32) {
    %c0_i32 = arith.constant 0 : i32
    %c0_i32_0 = arith.constant 0 : i32
    return %arg0, %c0_i32 : i32, i32
  }
  func.func @transform_1(%arg0: i32) -> (i32, i32) {
    %c0_i32 = arith.constant 0 : i32
    %c0_i32_0 = arith.constant 0 : i32
    return %arg0, %c0_i32 : i32, i32
  }
  func.func @transform_2(%arg0: i32) -> i32 {
    %c0_i32 = arith.constant 0 : i32
    %c0_i32_0 = arith.constant 0 : i32
    return %c0_i32 : i32
  }
  func.func @transform_3(%arg0: i32) -> i32 {
    %c0_i32 = arith.constant 0 : i32
    %c0_i32_0 = arith.constant 0 : i32
    return %c0_i32 : i32
  }
}

</mosaic_0001>

<llo_original>
// kernel: tpu_custom_call.1
$region0: #{tpu_custom_call.1}
  #allocation0 [shape = 'u32[]', space=smem, size = 0x4, offset = 0x4, fixed_abs, tag = 'smem constant byte address 0x4 - core index']
  #allocation1 [shape = 'u32[144,128]{1,0:T(1,128)}', space=vmem, size = 0x12000, scoped, tag = 'internal scratch']
  #allocation2 [shape = 'f32[8,128]{1,0:T(8,128)}', space=vmem, size = 0x1000, scoped, tag = 'scratch operand']
  #allocation3 [shape = 'f32[8,128]{1,0:T(8,128)}', space=vmem, size = 0x1000, scoped, tag = 'scratch operand']
  %s0 = inlined_call_operand.hbm [shape: f32[16,128], index: 0, kind: input, shape index: {}]
  %s1 = inlined_call_operand.hbm [shape: f32[16,128], index: 1, kind: input, shape index: {}]
  %s2 = inlined_call_operand.hbm [shape: f32[1], index: 2, kind: output, shape index: {0}]
  %s3 = inlined_call_operand.hbm [shape: f32[1], index: 3, kind: output, shape index: {1}]
  %4 = xla_tuple %s2, %s3
  %s5 = sld [smem:[#allocation0]]
  $region42: #{tpu_custom_call.1} parent=0
    _
  %s7 = ssub.s32 1, %s5
  %s8 = scalar_select 0, %s7, %s5
  $region1: #{tpu_custom_call.1} parent=0
    #allocation4 [shape = 'u8[8192]{0}', space=vmem, size = 0x2000, scoped, tag = 'input window, operand 0, single buffered']
    #allocation5 [shape = 's32[1]{0}', space=sflag, size = 0x4, scoped, tag = 'scoped memory for tpu_custom_call.1']
    #allocation6 [shape = 's32[1]{0}', space=sflag, size = 0x4, scoped, tag = 'scoped memory for tpu_custom_call.1']
    #allocation7 [shape = 'u8[8192]{0}', space=vmem, size = 0x2000, scoped, tag = 'input window, operand 1, single buffered']
    #allocation8 [shape = 's32[1]{0}', space=sflag, size = 0x4, scoped, tag = 'scoped memory for tpu_custom_call.1']
    #allocation9 [shape = 'u8[512]{0}', space=smem, size = 0x200, scoped, tag = 'output window, operand 0, single buffered']
    #allocation10 [shape = 'u8[512]{0}', space=smem, size = 0x200, scoped, tag = 'output window, operand 1, single buffered']
    #allocation11 [shape = 's32[1]{0}', space=sflag, size = 0x4, scoped, tag = 'scoped memory for tpu_custom_call.1']
    %9 = vsyncpa [#allocation5], 0
    %10 = vsyncpa [#allocation8], 0
    %11 = vsyncpa [#allocation6], 0
    %12 = vsyncpa [#allocation11], 0
    // Predicated region
    $region2: #{tpu_custom_call.1} parent=1 // pred_check
      _
    $region3: #{tpu_custom_call.1} parent=1 // pred_check_branch
      %14 = sbr.rel (0) target = $region5
    $region4: #{tpu_custom_call.1} parent=1 // pred_region
      %s16 = ssub.s32 256, 256
      %17 = vsyncadd [#allocation5], %s16
      %s18 = sshll.u32 [#allocation4], 4
      %s19 = int_to_ptr.vmem [resolvable:$true] %s18
      %24 = dma.hbm_to_vmem [thread:$0]  %s0, 256, %s19, [#allocation5], 128, 128, 8
    $region5: #{tpu_custom_call.1} parent=1 // pred_fallthru
      _
    // Predicated region
    $region6: #{tpu_custom_call.1} parent=1 // pred_check
      _
    $region7: #{tpu_custom_call.1} parent=1 // pred_check_branch
      %26 = sbr.rel (0) target = $region9
    $region8: #{tpu_custom_call.1} parent=1 // pred_region
      %s28 = ssub.s32 256, 256
      %29 = vsyncadd [#allocation8], %s28
      %s30 = sshll.u32 [#allocation7], 4
      %s31 = int_to_ptr.vmem [resolvable:$true] %s30
      %36 = dma.hbm_to_vmem [thread:$0]  %s1, 256, %s31, [#allocation8], 128, 128, 8
    $region9: #{tpu_custom_call.1} parent=1 // pred_fallthru
      _
    // Predicated region
    $region10: #{tpu_custom_call.1} parent=1 // pred_check
      _
    $region11: #{tpu_custom_call.1} parent=1 // pred_check_branch
      %38 = sbr.rel (0) target = $region13
    $region12: #{tpu_custom_call.1} parent=1 // pred_region
      %39 = dma.done [#allocation5], 256
    $region13: #{tpu_custom_call.1} parent=1 // pred_fallthru
      _
    // Predicated region
    $region14: #{tpu_custom_call.1} parent=1 // pred_check
      _
    $region15: #{tpu_custom_call.1} parent=1 // pred_check_branch
      %41 = sbr.rel (0) target = $region17
    $region16: #{tpu_custom_call.1} parent=1 // pred_region
      %42 = dma.done [#allocation8], 256
    $region17: #{tpu_custom_call.1} parent=1 // pred_fallthru
      _
    %p43 = scmp.eq.s32.totalorder 0, 0
    // Predicated region
    $region18: #{tpu_custom_call.1} parent=1 // pred_check
      %p44 = pneg %p43
    $region19: #{tpu_custom_call.1} parent=1 // pred_check_branch
      %46 = sbr.rel (%p44) target = $region21
    $region20: #{tpu_custom_call.1} parent=1 // pred_region
      %47 = vst [vmem:[#allocation2] sm:$0xff] 0.0
      %48 = vst [vmem:[#allocation3] sm:$0xff] 0.0
    $region21: #{tpu_custom_call.1} parent=1 // pred_fallthru
      _
    %v49 = vld [vmem:[#allocation4] sm:$0xff]
    %v50 = vld [vmem:[#allocation4 + $0x8] sm:$0xff]
    %v51 = vld [vmem:[#allocation7] sm:$0xff]
    %v52 = vld [vmem:[#allocation7 + $0x8] sm:$0xff]
    %v53 = vld [vmem:[#allocation2] sm:$0xff]
    %v54 = vmul.f32 %v49, %v51
    %v55 = vmul.f32 %v50, %v52
    %v56 = vadd.f32 %v54, %v55
    %v57 = vadd.f32 %v53, %v56
    %58 = vst [vmem:[#allocation2] sm:$0xff] %v57
    %v59 = vld [vmem:[#allocation3] sm:$0xff]
    %v60 = vadd.f32 %v49, %v51
    %v61 = vadd.f32 %v50, %v52
    %v62 = vadd.f32 %v60, %v61
    %v63 = vadd.f32 %v59, %v62
    %64 = vst [vmem:[#allocation3] sm:$0xff] %v63
    // Predicated region
    $region22: #{tpu_custom_call.1} parent=1 // pred_check
      %p65 = pneg %p43
    $region23: #{tpu_custom_call.1} parent=1 // pred_check_branch
      %67 = sbr.rel (%p65) target = $region25
    $region24: #{tpu_custom_call.1} parent=1 // pred_region
      %v68 = vld [vmem:[#allocation2] sm:$0xff]
      %69 = vadd.xlane.f32.xlu0 %v68
      %v70 = vpop.xlane.xlu0 %69
      %v71 = vrot.slane %v70, 4
      %v72 = vadd.f32 %v70, %v71
      %v73 = vrot.slane %v72, 2
      %v74 = vadd.f32 %v72, %v73
      %v75 = vrot.slane %v74, 1
      %v76 = vadd.f32 %v74, %v75
      %s77 = vtos %v76
      %s78 = scalar_lea.smem [#allocation9], 0
      %79 = sst [smem:[%s78]] %s77
      %v80 = vld [vmem:[#allocation3] sm:$0xff]
      %81 = vadd.xlane.f32.xlu0 %v80
      %v82 = vpop.xlane.xlu0 %81
      %v83 = vrot.slane %v82, 4
      %v84 = vadd.f32 %v82, %v83
      %v85 = vrot.slane %v84, 2
      %v86 = vadd.f32 %v84, %v85
      %v87 = vrot.slane %v86, 1
      %v88 = vadd.f32 %v86, %v87
      %s89 = vtos %v88
      %s90 = scalar_lea.smem [#allocation10], 0
      %91 = sst [smem:[%s90]] %s89
    $region25: #{tpu_custom_call.1} parent=1 // pred_fallthru
      _
    // Predicated region
    $region26: #{tpu_custom_call.1} parent=1 // pred_check
      _
    $region27: #{tpu_custom_call.1} parent=1 // pred_check_branch
      %93 = sbr.rel (0) target = $region29
    $region28: #{tpu_custom_call.1} parent=1 // pred_region
      %s95 = ssub.s32 16, 16
      %96 = vsyncadd [#allocation6], %s95
      %99 = dma.smem_to_hbm [#allocation9], 16, %s2, [#allocation6]
    $region29: #{tpu_custom_call.1} parent=1 // pred_fallthru
      _
    // Predicated region
    $region30: #{tpu_custom_call.1} parent=1 // pred_check
      _
    $region31: #{tpu_custom_call.1} parent=1 // pred_check_branch
      %101 = sbr.rel (0) target = $region33
    $region32: #{tpu_custom_call.1} parent=1 // pred_region
      %s103 = ssub.s32 16, 16
      %104 = vsyncadd [#allocation11], %s103
      %107 = dma.smem_to_hbm [#allocation10], 16, %s3, [#allocation11]
    $region33: #{tpu_custom_call.1} parent=1 // pred_fallthru
      _
    // Predicated region
    $region34: #{tpu_custom_call.1} parent=1 // pred_check
      _
    $region35: #{tpu_custom_call.1} parent=1 // pred_check_branch
      %109 = sbr.rel (0) target = $region37
    $region36: #{tpu_custom_call.1} parent=1 // pred_region
      %110 = dma.done [#allocation6], 16
    $region37: #{tpu_custom_call.1} parent=1 // pred_fallthru
      _
    // Predicated region
    $region38: #{tpu_custom_call.1} parent=1 // pred_check
      _
    $region39: #{tpu_custom_call.1} parent=1 // pred_check_branch
      %112 = sbr.rel (0) target = $region41
    $region40: #{tpu_custom_call.1} parent=1 // pred_region
      %113 = dma.done [#allocation11], 16
    $region41: #{tpu_custom_call.1} parent=1 // pred_fallthru
      _
    %114 = sfence
    %115 = vsyncpa [#allocation5], 1
    %116 = vsyncpa [#allocation8], 1
    %117 = vsyncpa [#allocation6], 1
    %118 = vsyncpa [#allocation11], 1

</llo_original>
